<compile_context>
chip_gen: v5e
topology: v5e:2x2
jax: 0.10.0
libtpu: 0.0.40
codegen_flags: <defaults>
</compile_context>

<pallas_src>
import functools
import math

import jax
import jax.numpy as jnp
from jax.experimental import pallas as pl
from jax.experimental.pallas import tpu as pltpu

_EPS = 1e-12  # matches torch.nn.functional.normalize eps (clamp on the norm)


def _round_up(v, m):
    return (v + m - 1) // m * m


def _pick_tile(dim_pad, cap, unit):
    """Largest multiple of `unit` that divides `dim_pad` and is <= max(cap, unit)."""
    cap = max(cap, unit)
    best = unit
    t = unit
    while t <= min(cap, dim_pad):
        if dim_pad % t == 0:
            best = t
        t += unit
    return best


def prepare_weight(weight, *, nb_proxy=1, to_reduce=False, compute_dtype=jnp.bfloat16):
    """One-time weight preparation (do at parameter init / load time, NOT per forward):
      * L2-normalize rows in f32 (folds the weight norm out of the kernel entirely),
      * if reducing, expose the proxy axis as a leading dim: (nb_proxy, nb_classes, D),
      * pad class / feature dims to multiples of 128 only,
      * cast to the streaming dtype (bf16 by default) so the kernel DMAs half the bytes.
    Returns (w_prepared of shape (P, G_pad, D_pad), out_dim)."""
    weight = jnp.asarray(weight, jnp.float32)
    C, D = weight.shape
    wn = weight / jnp.maximum(jnp.linalg.norm(weight, axis=1, keepdims=True), _EPS)
    if to_reduce and nb_proxy > 1:
        assert C % nb_proxy == 0, "Shape error"
        P, G = nb_proxy, C // nb_proxy
        w3 = jnp.transpose(wn.reshape(G, P, D), (1, 0, 2))   # (P, nb_classes, D)
    else:
        P, G = 1, C
        w3 = wn[None]                                        # (1, C, D)
    G_pad = _round_up(G, 128)
    D_pad = _round_up(D, 128)
    w_p = jnp.pad(w3, ((0, 0), (0, G_pad - G), (0, D_pad - D))).astype(compute_dtype)
    return w_p, G


def _cosine_kernel(sigma_ref, x_ref, w_ref, invx_ref, o_ref, acc_ref, *,
                   nb_groups, do_reduce, apply_sigma):
    """Grid = (j: class tiles, i: batch tiles, k: feature tiles), k innermost.

    x_ref    : (tm, tk)        raw input tile (compute_dtype)
    w_ref    : (P, tn, tk)     unit-norm weight tile (compute_dtype)
    invx_ref : (tm, 1)  f32    1 / max(||x_row||, eps), precomputed in the wrapper
    o_ref    : (tm, tn)        output tile (reduced logits if do_reduce else cosine logits)
    acc_ref  : (tm, P*tn) f32  matmul accumulator (proxy axis folded into N)
    """
    k = pl.program_id(2)
    P = nb_groups
    tn = o_ref.shape[1]
    tk = x_ref.shape[1]

    @pl.when(k == 0)
    def _init():
        acc_ref[...] = jnp.zeros_like(acc_ref)

    # Proxy axis folded into N: a single MXU call per K step into one accumulator.
    # (P, tn, tk) -> (P*tn, tk) only merges leading dims of an (8,128)-aligned tile: no relayout.
    w = w_ref[...].reshape(P * tn, tk)
    # NT contraction ((1,),(1,)) — weights stored (out, in) — is native on the MXU.
    acc_ref[...] += jax.lax.dot_general(
        x_ref[...], w,
        dimension_numbers=(((1,), (1,)), ((), ())),
        preferred_element_type=jnp.float32)

    @pl.when(k == pl.num_programs(2) - 1)
    def _finalize():
        inv_x = invx_ref[...]                         # (tm, 1) f32
        acc = acc_ref[...]                            # (tm, P*tn): x . w_hat, still missing 1/||x||
        if not do_reduce:
            # cos = acc * inv_x; sigma folded into the (tm,1) scale vector (no full-tile mul).
            scale = inv_x * sigma_ref[0, 0] if apply_sigma else inv_x
            o_ref[...] = (acc * scale).astype(o_ref.dtype)
        else:
            # Streaming softmax over the proxy axis (static lane slices, multiples of 128).
            m_raw = acc[:, 0:tn]
            for p in range(1, P):
                m_raw = jnp.maximum(m_raw, acc[:, p * tn:(p + 1) * tn])
            m_cos = m_raw * inv_x                     # inv_x > 0 => max commutes with the scale
            denom = jnp.zeros_like(m_cos)
            numer = jnp.zeros_like(m_cos)
            for p in range(P):
                c = acc[:, p * tn:(p + 1) * tn] * inv_x
                e = jnp.exp(c - m_cos)
                denom = denom + e
                numer = numer + e * c
            out = numer * pl.reciprocal(denom, approx=True)
            if apply_sigma:
                out = out * sigma_ref[0, 0]
            o_ref[...] = out.astype(o_ref.dtype)


@functools.partial(
    jax.jit, static_argnames=("out_dim", "apply_sigma", "tile_m", "tile_n", "tile_k"))
def _forward_impl(x, w_prepared, sigma_arr, *, out_dim, apply_sigma,
                  tile_m, tile_n, tile_k):
    B, D = x.shape
    P, G_pad, D_pad = w_prepared.shape
    assert D <= D_pad, (D, D_pad)
    compute_dtype = w_prepared.dtype
    do_reduce = P > 1

    B_pad = _round_up(B, 8)
    tm = _pick_tile(B_pad, tile_m, 8)
    tn = _pick_tile(G_pad, tile_n, 128)
    tk = _pick_tile(D_pad, tile_k, 128)

    # x row inverse norms computed ONCE here in f32 (not per class-tile inside the kernel).
    # Padded rows get inv_x = 0 so padded outputs are exactly 0.
    xf = x.astype(jnp.float32)
    inv_x = 1.0 / jnp.maximum(jnp.sqrt(jnp.sum(xf * xf, axis=1, keepdims=True)), _EPS)
    inv_x = jnp.pad(inv_x, ((0, B_pad - B), (0, 0)))

    # Stream x in compute_dtype (bf16 by default): halves x DMA, no in-kernel casts.
    # Zero padding is exact: zero feature columns add nothing to the dot, zero rows give zeros.
    x_p = jnp.pad(x.astype(compute_dtype), ((0, B_pad - B), (0, D_pad - D)))

    grid = (G_pad // tn, B_pad // tm, D_pad // tk)   # (class tiles, batch tiles, K tiles)

    kernel = functools.partial(
        _cosine_kernel, nb_groups=P, do_reduce=do_reduce, apply_sigma=apply_sigma)

    itemsize = jnp.dtype(compute_dtype).itemsize
    flops = 2 * B_pad * (P * G_pad) * D_pad
    bytes_accessed = (itemsize * (B_pad * D_pad * (G_pad // tn)           # x re-streamed / class tile
                                  + P * G_pad * D_pad * (B_pad // tm))    # W re-streamed / batch tile
                      + 4 * (B_pad * G_pad + B_pad))
    transcendentals = P * B_pad * G_pad if do_reduce else 0

    out_pad = pl.pallas_call(
        kernel,
        out_shape=jax.ShapeDtypeStruct((B_pad, G_pad), jnp.float32),
        grid_spec=pltpu.PrefetchScalarGridSpec(
            num_scalar_prefetch=0,
            grid=grid,
            in_specs=[
                pl.BlockSpec(memory_space=pltpu.MemorySpace.SMEM),        # sigma (1,1) scalar
                pl.BlockSpec((tm, tk), lambda j, i, k: (i, k)),            # x tile
                pl.BlockSpec((P, tn, tk), lambda j, i, k: (0, j, k)),      # unit-norm weight tile
                pl.BlockSpec((tm, 1), lambda j, i, k: (i, 0)),             # 1/||x|| per row
            ],
            out_specs=pl.BlockSpec((tm, tn), lambda j, i, k: (i, j)),
            scratch_shapes=[
                pltpu.VMEM((tm, P * tn), jnp.float32),   # single folded matmul accumulator
            ],
        ),
        compiler_params=pltpu.CompilerParams(
            dimension_semantics=("parallel", "parallel", "arbitrary"),
            # Headroom over the 16/32 MiB scoped defaults while staying under v7x's 64 MiB.
            vmem_limit_bytes=48 * 1024 * 1024,
        ),
        cost_estimate=pl.CostEstimate(
            flops=flops, transcendentals=transcendentals, bytes_accessed=bytes_accessed),
    )(sigma_arr, x_p, w_prepared, inv_x)

    return out_pad[:B, :out_dim]


def second_cosine_linear_forward(x, w_prepared, sigma, *, out_dim,
                                 tile_m=512, tile_n=256, tile_k=512):
    """Pallas implementation of SecondCosineLinear.forward(x) (class_index=None path).

    `w_prepared` must come from `prepare_weight` (done once, at init time)."""
    apply_sigma = sigma is not None
    sigma_arr = (jnp.asarray(sigma, jnp.float32).reshape(1, 1) if apply_sigma
                 else jnp.ones((1, 1), jnp.float32))
    logits = _forward_impl(x, w_prepared, sigma_arr, out_dim=out_dim,
                           apply_sigma=apply_sigma,
                           tile_m=tile_m, tile_n=tile_n, tile_k=tile_k)
    return {'logits': logits}


def _reference_forward(x, weight, sigma, *, nb_proxy=1, to_reduce=False):
    """Pure-JAX reference mirroring the PyTorch module (class_index=None path)."""
    xn = x / jnp.maximum(jnp.linalg.norm(x, axis=1, keepdims=True), _EPS)
    wn = weight / jnp.maximum(jnp.linalg.norm(weight, axis=1, keepdims=True), _EPS)
    out = xn @ wn.T
    if to_reduce and nb_proxy > 1:
        bs = out.shape[0]
        nc = out.shape[1] // nb_proxy
        s = out.reshape(bs, nc, nb_proxy)
        att = jax.nn.softmax(s, axis=-1)
        out = (att * s).sum(-1)
    if sigma is not None:
        out = sigma[0] * out
    return out


def _check(name, got, want, atol, rtol):
    assert got.shape == want.shape, (name, got.shape, want.shape)
    err = float(jnp.max(jnp.abs(got - want)))
    assert jnp.allclose(got, want, atol=atol, rtol=rtol), f"{name}: max abs err {err}"


if __name__ == "__main__":
    # Small shapes consistent with the module.
    batch = 8
    in_features = 32
    out_features = 8
    nb_proxy = 2

    key = jax.random.PRNGKey(0)
    kx, kw = jax.random.split(key)

    x = jax.random.normal(kx, (batch, in_features), dtype=jnp.float32)
    # Deterministic init matching reset_parameters(): U(-stdv, stdv), sigma = 1.
    stdv = 1.0 / math.sqrt(in_features)
    weight = jax.random.uniform(
        kw, (out_features * nb_proxy, in_features),
        dtype=jnp.float32, minval=-stdv, maxval=stdv)
    sigma = jnp.ones((1,), dtype=jnp.float32)

    # 1) f32 streaming, fused proxy reduction (approx reciprocal in softmax -> relaxed tol).
    w_f32, G = prepare_weight(weight, nb_proxy=nb_proxy, to_reduce=True,
                              compute_dtype=jnp.float32)
    out = second_cosine_linear_forward(x, w_f32, sigma, out_dim=G)
    logits = jax.block_until_ready(out['logits'])
    ref = _reference_forward(x, weight, sigma, nb_proxy=nb_proxy, to_reduce=True)
    assert logits.shape == (batch, out_features), logits.shape
    _check("f32 reduce", logits, ref, atol=5e-3, rtol=5e-3)

    # 2) bf16 streaming fast path (default), fused proxy reduction -> relaxed tolerance.
    w_bf16, G = prepare_weight(weight, nb_proxy=nb_proxy, to_reduce=True,
                               compute_dtype=jnp.bfloat16)
    out = second_cosine_linear_forward(x, w_bf16, sigma, out_dim=G)
    logits_bf16 = jax.block_until_ready(out['logits'])
    _check("bf16 reduce", logits_bf16, ref, atol=3e-2, rtol=3e-2)

    # 3) f32 streaming, no proxy reduction (raw (B, out_features*nb_proxy) cosine logits).
    w_raw, C = prepare_weight(weight, nb_proxy=nb_proxy, to_reduce=False,
                              compute_dtype=jnp.float32)
    out = second_cosine_linear_forward(x, w_raw, sigma, out_dim=C)
    logits_raw = jax.block_until_ready(out['logits'])
    ref_raw = _reference_forward(x, weight, sigma, nb_proxy=nb_proxy, to_reduce=False)
    assert logits_raw.shape == (batch, out_features * nb_proxy), logits_raw.shape
    _check("f32 no-reduce", logits_raw, ref_raw, atol=1e-4, rtol=1e-4)

    print("KERNEL_OK")
</pallas_src>

<mosaic_0001>
module attributes {stable_mosaic.version = 11 : i64} {
  func.func @_cosine_kernel(%arg0: i32, %arg1: i32, %arg2: i32, %arg3: memref<1x1xf32, #tpu.memory_space<smem>>, %arg4: memref<8x128xf32, #tpu.memory_space<vmem>>, %arg5: memref<2x128x128xf32, #tpu.memory_space<vmem>>, %arg6: memref<8x1xf32, #tpu.memory_space<vmem>>, %arg7: memref<8x128xf32, #tpu.memory_space<vmem>>, %arg8: memref<8x256xf32, #tpu.memory_space<vmem>>) attributes {dimension_semantics = [#tpu.dimension_semantics<parallel>, #tpu.dimension_semantics<parallel>, #tpu.dimension_semantics<arbitrary>], iteration_bounds = array<i64: 1, 1, 1>, scalar_prefetch = 0 : i64, scratch_operands = 1 : i64, tpu.core_type = #tpu.core_type<tc>, window_params = [{transform_indices = @transform_0, window_bounds = array<i64: 1, 1>}, {transform_indices = @transform_1, window_bounds = array<i64: 8, 128>}, {transform_indices = @transform_2, window_bounds = array<i64: 2, 128, 128>}, {transform_indices = @transform_3, window_bounds = array<i64: 8, 1>}, {transform_indices = @transform_4, window_bounds = array<i64: 8, 128>}]} {
    %c0_i32 = arith.constant 0 : i32
    %0 = arith.cmpi eq, %arg2, %c0_i32 : i32
    %1 = arith.extui %0 : i1 to i32
    %c0_i32_0 = arith.constant 0 : i32
    %2 = arith.cmpi ne, %1, %c0_i32_0 : i32
    scf.if %2 {
      %cst_11 = arith.constant 0.000000e+00 : f32
      %13 = vector.broadcast %cst_11 : f32 to vector<8x256xf32>
      %c0_12 = arith.constant 0 : index
      %c0_13 = arith.constant 0 : index
      %14 = vector.load %arg8[%c0_12, %c0_13] : memref<8x256xf32, #tpu.memory_space<vmem>>, vector<8x256xf32>
      tpu.vector_store %arg8[%c0_12, %c0_13], %13 {strides = array<i32>} : memref<8x256xf32, #tpu.memory_space<vmem>>, vector<8x256xf32>,
    } else {
    }
    %c0 = arith.constant 0 : index
    %c0_1 = arith.constant 0 : index
    %c0_2 = arith.constant 0 : index
    %3 = vector.load %arg5[%c0, %c0_1, %c0_2] : memref<2x128x128xf32, #tpu.memory_space<vmem>>, vector<2x128x128xf32>
    %4 = vector.shape_cast %3 : vector<2x128x128xf32> to vector<256x128xf32>
    %c0_3 = arith.constant 0 : index
    %c0_4 = arith.constant 0 : index
    %5 = vector.load %arg8[%c0_3, %c0_4] : memref<8x256xf32, #tpu.memory_space<vmem>>, vector<8x256xf32>
    %c0_5 = arith.constant 0 : index
    %c0_6 = arith.constant 0 : index
    %6 = vector.load %arg4[%c0_5, %c0_6] : memref<8x128xf32, #tpu.memory_space<vmem>>, vector<8x128xf32>
    %cst = arith.constant dense<0.000000e+00> : vector<8x256xf32>
    %7 = tpu.matmul %6, %4, %cst {dimension_numbers = #tpu.dot_dimension_numbers<[1], [1], [0], [0], [0, 0, 1, 0], [], []>} : vector<8x128xf32>, vector<256x128xf32>, vector<8x256xf32> -> vector<8x256xf32>
    %8 = arith.addf %5, %7 : vector<8x256xf32>
    %c0_7 = arith.constant 0 : index
    %c0_8 = arith.constant 0 : index
    %9 = vector.load %arg8[%c0_7, %c0_8] : memref<8x256xf32, #tpu.memory_space<vmem>>, vector<8x256xf32>
    tpu.vector_store %arg8[%c0_7, %c0_8], %8 {strides = array<i32>} : memref<8x256xf32, #tpu.memory_space<vmem>>, vector<8x256xf32>,
    %c0_i32_9 = arith.constant 0 : i32
    %10 = arith.cmpi eq, %arg2, %c0_i32_9 : i32
    %11 = arith.extui %10 : i1 to i32
    %c0_i32_10 = arith.constant 0 : i32
    %12 = arith.cmpi ne, %11, %c0_i32_10 : i32
    scf.if %12 {
      %c0_11 = arith.constant 0 : index
      %c0_12 = arith.constant 0 : index
      %13 = vector.load %arg6[%c0_11, %c0_12] : memref<8x1xf32, #tpu.memory_space<vmem>>, vector<8x1xf32>
      %c0_13 = arith.constant 0 : index
      %c0_14 = arith.constant 0 : index
      %14 = vector.load %arg8[%c0_13, %c0_14] : memref<8x256xf32, #tpu.memory_space<vmem>>, vector<8x256xf32>
      %15 = vector.extract_strided_slice %14 {offsets = [0, 0], sizes = [8, 128], strides = [1, 1]} : vector<8x256xf32> to vector<8x128xf32>
      %16 = vector.extract_strided_slice %14 {offsets = [0, 128], sizes = [8, 128], strides = [1, 1]} : vector<8x256xf32> to vector<8x128xf32>
      %17 = arith.maximumf %15, %16 : vector<8x128xf32>
      %18 = vector.broadcast %13 : vector<8x1xf32> to vector<8x128xf32>
      %19 = arith.mulf %17, %18 : vector<8x128xf32>
      %cst_15 = arith.constant 0.000000e+00 : f32
      %20 = vector.broadcast %cst_15 : f32 to vector<8x128xf32>
      %cst_16 = arith.constant 0.000000e+00 : f32
      %21 = vector.broadcast %cst_16 : f32 to vector<8x128xf32>
      %22 = vector.extract_strided_slice %14 {offsets = [0, 0], sizes = [8, 128], strides = [1, 1]} : vector<8x256xf32> to vector<8x128xf32>
      %23 = vector.broadcast %13 : vector<8x1xf32> to vector<8x128xf32>
      %24 = arith.mulf %22, %23 : vector<8x128xf32>
      %25 = arith.subf %24, %19 : vector<8x128xf32>
      %26 = math.exp %25 : vector<8x128xf32>
      %27 = arith.addf %20, %26 : vector<8x128xf32>
      %28 = arith.mulf %26, %24 : vector<8x128xf32>
      %29 = arith.addf %21, %28 : vector<8x128xf32>
      %30 = vector.extract_strided_slice %14 {offsets = [0, 128], sizes = [8, 128], strides = [1, 1]} : vector<8x256xf32> to vector<8x128xf32>
      %31 = vector.broadcast %13 : vector<8x1xf32> to vector<8x128xf32>
      %32 = arith.mulf %30, %31 : vector<8x128xf32>
      %33 = arith.subf %32, %19 : vector<8x128xf32>
      %34 = math.exp %33 : vector<8x128xf32>
      %35 = arith.addf %27, %34 : vector<8x128xf32>
      %36 = arith.mulf %34, %32 : vector<8x128xf32>
      %37 = arith.addf %29, %36 : vector<8x128xf32>
      %38 = tpu.reciprocal %35 {approx = true} : vector<8x128xf32> -> vector<8x128xf32>
      %39 = arith.mulf %37, %38 : vector<8x128xf32>
      %c0_17 = arith.constant 0 : index
      %c0_18 = arith.constant 0 : index
      %40 = memref.load %arg3[%c0_17, %c0_18] : memref<1x1xf32, #tpu.memory_space<smem>>
      %41 = vector.broadcast %40 : f32 to vector<8x128xf32>
      %42 = arith.mulf %39, %41 : vector<8x128xf32>
      %c0_19 = arith.constant 0 : index
      %c0_20 = arith.constant 0 : index
      %43 = vector.load %arg7[%c0_19, %c0_20] : memref<8x128xf32, #tpu.memory_space<vmem>>, vector<8x128xf32>
      tpu.vector_store %arg7[%c0_19, %c0_20], %42 {strides = array<i32>} : memref<8x128xf32, #tpu.memory_space<vmem>>, vector<8x128xf32>,
    } else {
    }
    return
  }
  func.func @transform_0(%arg0: i32, %arg1: i32, %arg2: i32) -> (i32, i32) {
    %c0_i32 = arith.constant 0 : i32
    %c0_i32_0 = arith.constant 0 : i32
    %c0_i32_1 = arith.constant 0 : i32
    return %c0_i32, %c0_i32_0 : i32, i32
  }
  func.func @transform_1(%arg0: i32, %arg1: i32, %arg2: i32) -> (i32, i32) {
    %c0_i32 = arith.constant 0 : i32
    return %arg1, %arg2 : i32, i32
  }
  func.func @transform_2(%arg0: i32, %arg1: i32, %arg2: i32) -> (i32, i32, i32) {
    %c0_i32 = arith.constant 0 : i32
    %c0_i32_0 = arith.constant 0 : i32
    return %c0_i32, %arg0, %arg2 : i32, i32, i32
  }
  func.func @transform_3(%arg0: i32, %arg1: i32, %arg2: i32) -> (i32, i32) {
    %c0_i32 = arith.constant 0 : i32
    %c0_i32_0 = arith.constant 0 : i32
    return %arg1, %c0_i32 : i32, i32
  }
  func.func @transform_4(%arg0: i32, %arg1: i32, %arg2: i32) -> (i32, i32) {
    %c0_i32 = arith.constant 0 : i32
    return %arg1, %arg0 : i32, i32
  }
}

</mosaic_0001>

<llo_original>
// kernel: _forward_impl.1
$region0: #{_forward_impl.1}
  #allocation0 [shape = 'u32[]', space=smem, size = 0x4, offset = 0x4, fixed_abs, tag = 'smem constant byte address 0x4 - core index']
  #allocation1 [shape = 'u32[72,128]{1,0:T(1,128)}', space=vmem, size = 0x9000, scoped, tag = 'internal scratch']
  #allocation2 [shape = 'f32[8,256]{1,0:T(8,128)}', space=vmem, size = 0x2000, scoped, tag = 'scratch operand']
  #allocation3 [shape = 'f32[1,1]{1,0:T(1,128)S(6)}', space=smem, size = 0x200, scoped, tag = 'scoped memory for _forward_impl.1']
  %s0 = inlined_call_operand.<no memory space> [shape: f32[1,1], index: 0, kind: input, shape index: {}]
  %s1 = inlined_call_operand.vmem [shape: f32[8,128], index: 1, kind: input, shape index: {}]
  %s2 = inlined_call_operand.hbm [shape: f32[2,128,128], index: 2, kind: input, shape index: {}]
  %s3 = inlined_call_operand.vmem [shape: f32[8,1], index: 3, kind: input, shape index: {}]
  %s4 = inlined_call_operand.hbm [shape: f32[8,128], index: 4, kind: output, shape index: {}]
  %s5 = sld [smem:[#allocation0]]
  $region38: #{_forward_impl.1} parent=0
    _
  %s7 = ssub.s32 1, %s5
  %s8 = scalar_select 0, %s7, %s5
  %9 = sst [smem:[#allocation3]] %s0
  $region1: #{_forward_impl.1} parent=0
    #allocation4 [shape = 'u8[131072]{0}', space=vmem, size = 0x20000, scoped, tag = 'input window, operand 2, single buffered']
    #allocation5 [shape = 's32[1]{0}', space=sflag, size = 0x4, scoped, tag = 'scoped memory for _forward_impl.1']
    #allocation6 [shape = 's32[1]{0}', space=sflag, size = 0x4, scoped, tag = 'scoped memory for _forward_impl.1']
    #allocation7 [shape = 'u8[4096]{0}', space=vmem, size = 0x1000, scoped, tag = 'output window, operand 0, single buffered']
    %10 = vsyncpa [#allocation5], 0
    %11 = vsyncpa [#allocation6], 0
    // Predicated region
    $region2: #{_forward_impl.1} parent=1 // pred_check
      _
    $region3: #{_forward_impl.1} parent=1 // pred_check_branch
      %13 = sbr.rel (0) target = $region5
    $region4: #{_forward_impl.1} parent=1 // pred_region
      _
    $region5: #{_forward_impl.1} parent=1 // pred_fallthru
      _
    // Predicated region
    $region6: #{_forward_impl.1} parent=1 // pred_check
      _
    $region7: #{_forward_impl.1} parent=1 // pred_check_branch
      %15 = sbr.rel (0) target = $region9
    $region8: #{_forward_impl.1} parent=1 // pred_region
      _
    $region9: #{_forward_impl.1} parent=1 // pred_fallthru
      _
    // Predicated region
    $region10: #{_forward_impl.1} parent=1 // pred_check
      _
    $region11: #{_forward_impl.1} parent=1 // pred_check_branch
      %17 = sbr.rel (0) target = $region13
    $region12: #{_forward_impl.1} parent=1 // pred_region
      %19 = vsyncadd [#allocation5], 0
      %s20 = sshll.u32 %s2, 4
      %s21 = int_to_ptr.hbm [resolvable:$true] %s20
      %s22 = sshll.u32 [#allocation4], 4
      %s23 = int_to_ptr.vmem [resolvable:$true] %s22
      %28 = dma.hbm_to_vmem [thread:$0]  %s21, 4096, %s23, [#allocation5], 128, 128, 8
    $region13: #{_forward_impl.1} parent=1 // pred_fallthru
      _
    // Predicated region
    $region14: #{_forward_impl.1} parent=1 // pred_check
      _
    $region15: #{_forward_impl.1} parent=1 // pred_check_branch
      %30 = sbr.rel (0) target = $region17
    $region16: #{_forward_impl.1} parent=1 // pred_region
      _
    $region17: #{_forward_impl.1} parent=1 // pred_fallthru
      _
    // Predicated region
    $region18: #{_forward_impl.1} parent=1 // pred_check
      _
    $region19: #{_forward_impl.1} parent=1 // pred_check_branch
      %32 = sbr.rel (0) target = $region21
    $region20: #{_forward_impl.1} parent=1 // pred_region
      %34 = dma.done [#allocation5], 4096
    $region21: #{_forward_impl.1} parent=1 // pred_fallthru
      _
    %p35 = scmp.eq.s32.totalorder 0, 0
    // Predicated region
    $region22: #{_forward_impl.1} parent=1 // pred_check
      %p36 = pneg %p35
    $region23: #{_forward_impl.1} parent=1 // pred_check_branch
      %38 = sbr.rel (%p36) target = $region25
    $region24: #{_forward_impl.1} parent=1 // pred_region
      %39 = vst [vmem:[#allocation2] sm:$0xff] 0.0
      %40 = vst [vmem:[#allocation2 + $0x8] sm:$0xff] 0.0
    $region25: #{_forward_impl.1} parent=1 // pred_fallthru
      _
    %v41 = vld [vmem:[#allocation4] sm:$0xff]
    %v42 = vld [vmem:[#allocation4 + $0x8] sm:$0xff]
    %v43 = vld [vmem:[#allocation4 + $0x10] sm:$0xff]
    %v44 = vld [vmem:[#allocation4 + $0x18] sm:$0xff]
    %v45 = vld [vmem:[#allocation4 + $0x20] sm:$0xff]
    %v46 = vld [vmem:[#allocation4 + $0x28] sm:$0xff]
    %v47 = vld [vmem:[#allocation4 + $0x30] sm:$0xff]
    %v48 = vld [vmem:[#allocation4 + $0x38] sm:$0xff]
    %v49 = vld [vmem:[#allocation4 + $0x40] sm:$0xff]
    %v50 = vld [vmem:[#allocation4 + $0x48] sm:$0xff]
    %v51 = vld [vmem:[#allocation4 + $0x50] sm:$0xff]
    %v52 = vld [vmem:[#allocation4 + $0x58] sm:$0xff]
    %v53 = vld [vmem:[#allocation4 + $0x60] sm:$0xff]
    %v54 = vld [vmem:[#allocation4 + $0x68] sm:$0xff]
    %v55 = vld [vmem:[#allocation4 + $0x70] sm:$0xff]
    %v56 = vld [vmem:[#allocation4 + $0x78] sm:$0xff]
    %v57 = vld [vmem:[#allocation4 + $0x80] sm:$0xff]
    %v58 = vld [vmem:[#allocation4 + $0x88] sm:$0xff]
    %v59 = vld [vmem:[#allocation4 + $0x90] sm:$0xff]
    %v60 = vld [vmem:[#allocation4 + $0x98] sm:$0xff]
    %v61 = vld [vmem:[#allocation4 + $0xa0] sm:$0xff]
    %v62 = vld [vmem:[#allocation4 + $0xa8] sm:$0xff]
    %v63 = vld [vmem:[#allocation4 + $0xb0] sm:$0xff]
    %v64 = vld [vmem:[#allocation4 + $0xb8] sm:$0xff]
    %v65 = vld [vmem:[#allocation4 + $0xc0] sm:$0xff]
    %v66 = vld [vmem:[#allocation4 + $0xc8] sm:$0xff]
    %v67 = vld [vmem:[#allocation4 + $0xd0] sm:$0xff]
    %v68 = vld [vmem:[#allocation4 + $0xd8] sm:$0xff]
    %v69 = vld [vmem:[#allocation4 + $0xe0] sm:$0xff]
    %v70 = vld [vmem:[#allocation4 + $0xe8] sm:$0xff]
    %v71 = vld [vmem:[#allocation4 + $0xf0] sm:$0xff]
    %v72 = vld [vmem:[#allocation4 + $0xf8] sm:$0xff]
    %v73 = vld [vmem:[#allocation2] sm:$0xff]
    %v74 = vld [vmem:[#allocation2 + $0x8] sm:$0xff]
    %v75 = vld [vmem:[%s1] sm:$0xff]
    %76 = vmatpush.xpose.msra.mxu0 %v56
    %77 = vmatpush.xpose.msra.mxu0 %v55
    %78 = vmatpush.xpose.msra.mxu0 %v54
    %79 = vmatpush.xpose.msra.mxu0 %v53
    %80 = vmatpush.xpose.msra.mxu0 %v52
    %81 = vmatpush.xpose.msra.mxu0 %v51
    %82 = vmatpush.xpose.msra.mxu0 %v50
    %83 = vmatpush.xpose.msra.mxu0 %v49
    %84 = vmatpush.xpose.msra.mxu0 %v48
    %85 = vmatpush.xpose.msra.mxu0 %v47
    %86 = vmatpush.xpose.msra.mxu0 %v46
    %87 = vmatpush.xpose.msra.mxu0 %v45
    %88 = vmatpush.xpose.msra.mxu0 %v44
    %89 = vmatpush.xpose.msra.mxu0 %v43
    %90 = vmatpush.xpose.msra.mxu0 %v42
    %91 = vmatpush.xpose.msra.mxu0 %v41
    %92 = vmatmul.f32.gmra.mxu0 %v75
    %v93 = vpop.f32.mrf.mxu0
    %v94 = vadd.f32 0.0, %v93
    %95 = vdwg.mxu0
    %96 = vmatpush.xpose.msra.mxu0 %v72
    %97 = vmatpush.xpose.msra.mxu0 %v71
    %98 = vmatpush.xpose.msra.mxu0 %v70
    %99 = vmatpush.xpose.msra.mxu0 %v69
    %100 = vmatpush.xpose.msra.mxu0 %v68
    %101 = vmatpush.xpose.msra.mxu0 %v67
    %102 = vmatpush.xpose.msra.mxu0 %v66
    %103 = vmatpush.xpose.msra.mxu0 %v65
    %104 = vmatpush.xpose.msra.mxu0 %v64
    %105 = vmatpush.xpose.msra.mxu0 %v63
    %106 = vmatpush.xpose.msra.mxu0 %v62
    %107 = vmatpush.xpose.msra.mxu0 %v61
    %108 = vmatpush.xpose.msra.mxu0 %v60
    %109 = vmatpush.xpose.msra.mxu0 %v59
    %110 = vmatpush.xpose.msra.mxu0 %v58
    %111 = vmatpush.xpose.msra.mxu0 %v57
    %112 = vmatmul.f32.gmra.mxu0 %v75
    %v113 = vpop.f32.mrf.mxu0
    %v114 = vadd.f32 0.0, %v113
    %115 = vdwg.mxu0
    %v116 = vadd.f32 %v73, %v94
    %v117 = vadd.f32 %v74, %v114
    %118 = vst [vmem:[#allocation2] sm:$0xff] %v116
    %119 = vst [vmem:[#allocation2 + $0x8] sm:$0xff] %v117
    // Predicated region
    $region26: #{_forward_impl.1} parent=1 // pred_check
      %p120 = pneg %p35
    $region27: #{_forward_impl.1} parent=1 // pred_check_branch
      %122 = sbr.rel (%p120) target = $region29
    $region28: #{_forward_impl.1} parent=1 // pred_region
      %v123 = vld [vmem:[%s3] sm:$0xff]
      %v124 = vld [vmem:[#allocation2] sm:$0xff]
      %v125 = vld [vmem:[#allocation2 + $0x8] sm:$0xff]
      %v126 = vmax.f32 %v124, %v125
      %128 = vset.pattern.permute.xlu0 0
      %129 = vperm.xlu0 %128, %v123
      %v130 = vpop.permute.xlu0 %129
      %v132 = vmul.f32 %v126, %v130
      %v133 = vmul.f32 %v124, %v130
      %v134 = vsub.f32 %v133, %v132
      %v135 = vmul.f32 %v134, 1.442695
      %v136 = vpow.pop %v135
      %v137 = vadd.f32 %v136, 0.0
      %v138 = vmul.f32 %v136, %v133
      %v139 = vadd.f32 %v138, 0.0
      %v140 = vmul.f32 %v125, %v130
      %v141 = vsub.f32 %v140, %v132
      %v142 = vmul.f32 %v141, 1.442695
      %v143 = vpow.pop %v142
      %v144 = vadd.f32 %v137, %v143
      %v145 = vmul.f32 %v143, %v140
      %v146 = vadd.f32 %v139, %v145
      %v147 = vrcp.pop %v144
      %v148 = vmul.f32 %v146, %v147
      %s149 = sld [smem:[#allocation3]]
      %v150 = vstv %s149
      %v151 = vmul.f32 %v148, %v150
      %152 = vst [vmem:[#allocation7] sm:$0xff] %v151
    $region29: #{_forward_impl.1} parent=1 // pred_fallthru
      _
    // Predicated region
    $region30: #{_forward_impl.1} parent=1 // pred_check
      _
    $region31: #{_forward_impl.1} parent=1 // pred_check_branch
      %154 = sbr.rel (0) target = $region33
    $region32: #{_forward_impl.1} parent=1 // pred_region
      %156 = vsyncadd [#allocation6], 0
      %s158 = sshll.u32 [#allocation7], 4
      %s159 = int_to_ptr.vmem [resolvable:$true] %s158
      %s160 = sshll.u32 %s4, 4
      %s161 = int_to_ptr.hbm [resolvable:$true] %s160
      %163 = dma.vmem_to_hbm [thread:$0]  %s159, 128, %s161, [#allocation6]
    $region33: #{_forward_impl.1} parent=1 // pred_fallthru
      _
    // Predicated region
    $region34: #{_forward_impl.1} parent=1 // pred_check
      _
    $region35: #{_forward_impl.1} parent=1 // pred_check_branch
      %165 = sbr.rel (0) target = $region37
    $region36: #{_forward_impl.1} parent=1 // pred_region
      %167 = dma.done [#allocation6], 128
    $region37: #{_forward_impl.1} parent=1 // pred_fallthru
      _
    %168 = vsyncpa [#allocation5], 1
    %169 = vsyncpa [#allocation6], 1

</llo_original>
